<compile_context>
chip_gen: v5e
topology: v5e:2x2
jax: 0.10.0
libtpu: 0.0.40
codegen_flags: <defaults>
</compile_context>

<pallas_src>
import functools

import jax
import jax.numpy as jnp
from jax.experimental import pallas as pl
from jax.experimental.pallas import tpu as pltpu


def cnn_kernel(x_ref, wcol_ref, bconv_ref, wfc_ref, bfc_ref, out_ref, xcol_scr,
               *, t_valid, t_pad, emb_dim, ke):
    # x_ref:     (TB, L*E)           bf16  gathered embeddings, one row per sentence
    # wcol_ref:  (KE_pad, Cout)      bf16  conv weight in im2col layout (zero-padded rows)
    # bconv_ref: (1, Cout)           f32
    # wfc_ref:   (Cout, LBL_pad)     bf16  (zero-padded cols)
    # bfc_ref:   (1, LBL_pad)        f32   (zero-padded)
    # out_ref:   (TB, LBL_pad)       f32
    # xcol_scr:  (T_pad, TB, KE_pad) bf16  persistent VMEM im2col staging buffer
    tb = out_ref.shape[0]
    ke_pad = xcol_scr.shape[-1]

    # One-time init: lane-pad columns [KE:KE_pad] and time-pad planes [T:T_pad] stay zero
    # forever (never overwritten below), so no garbage/NaN bits can reach the MXU.
    @pl.when(pl.program_id(0) == 0)
    def _():
        xcol_scr[...] = jnp.zeros_like(xcol_scr)

    x = x_ref[...]                                              # (TB, L*E) bf16
    # In-VMEM im2col: output position t uses the contiguous lane window [t*E, t*E + K*E).
    for t in range(t_valid):                                    # static unroll, T is small
        xcol_scr[t, :, 0:ke] = x[:, t * emb_dim:t * emb_dim + ke]

    # Single MXU matmul for the whole conv (valid padding), f32 accumulation.
    xcol = xcol_scr[...].reshape(t_pad * tb, ke_pad)            # layout-preserving merge
    acc = jnp.dot(xcol, wcol_ref[...], preferred_element_type=jnp.float32)
    acc = jnp.maximum(acc + bconv_ref[...], 0.0)                # bias + ReLU (f32 epilogue)

    cout = acc.shape[-1]
    acc = acc.reshape(t_pad, tb, cout)
    if t_valid != t_pad:
        # Padded time planes carry ReLU(b_conv) >= 0; mask them to 0.  Valid rows are
        # >= 0 after ReLU, so zeroing pads cannot change the max.  Mask is (T_pad,1,1).
        t_idx = jax.lax.broadcasted_iota(jnp.int32, (t_pad, 1, 1), 0)
        acc = jnp.where(t_idx < t_valid, acc, 0.0)
    pooled = jnp.max(acc, axis=0)                               # (TB, Cout), elementwise across planes

    logits = jnp.dot(pooled.astype(wfc_ref.dtype), wfc_ref[...],
                     preferred_element_type=jnp.float32) + bfc_ref[...]
    out_ref[...] = logits.astype(out_ref.dtype)


def cnn_forward(sentence, emb_table, w_conv_kec, b_conv, w_fc_cl, b_fc,
                *, batch_tile=None):
    """Forward pass matching the PyTorch CNN module.

    sentence:   (B, L) int32 token ids
    emb_table:  (V, E) f32
    w_conv_kec: (K, E, Cout)  == transpose of torch Conv1d weight (Cout, E, K)
    b_conv:     (Cout,)
    w_fc_cl:    (Cout, label) == transpose of torch Linear weight
    b_fc:       (label,)
    returns:    (B, label) f32 logits
    """
    B, L = sentence.shape
    V, E = emb_table.shape
    K, _, Cout = w_conv_kec.shape
    label_size = w_fc_cl.shape[1]

    T = L - K + 1                                    # valid conv output length
    T_pad = ((T + 7) // 8) * 8                       # sublane-align the time axis
    KE = K * E
    KE_pad = ((KE + 127) // 128) * 128               # contraction pad to 128 (NOT 256)
    LBL_pad = ((label_size + 127) // 128) * 128      # lane-dense output stores
    LE = L * E

    # ---- batch tiling: fill the MXU M dim, keep >=2 grid steps when the batch allows
    # (so the "parallel" batch axis can shard across v7x's two TensorCores). ----
    B8 = ((B + 7) // 8) * 8
    if batch_tile is None:
        n_tiles = -(-B8 // 256)                      # target ~256 rows per tile
        if n_tiles == 1 and B8 >= 64:
            n_tiles = 2
        TB = ((-(-B8 // n_tiles) + 7) // 8) * 8
    else:
        TB = batch_tile
    B_pad = ((B8 + TB - 1) // TB) * TB
    grid = (B_pad // TB,)

    # ---- wrapper-side layout plumbing (NO im2col expansion in HBM) ----
    sent = jnp.pad(sentence, ((0, B_pad - B), (0, 0)))          # pad rows use token 0
    # Gather first, cast second: only the used rows go through the bf16 cast.
    x2d = emb_table[sent].astype(jnp.bfloat16).reshape(B_pad, LE)   # (B_pad, L*E) bf16

    w_col = w_conv_kec.reshape(KE, Cout).astype(jnp.bfloat16)
    w_col = jnp.pad(w_col, ((0, KE_pad - KE), (0, 0)))          # (KE_pad, Cout), zero rows
    w_fc_pad = jnp.pad(w_fc_cl.astype(jnp.bfloat16),
                       ((0, 0), (0, LBL_pad - label_size)))     # (Cout, LBL_pad)
    b_fc_pad = jnp.pad(b_fc.astype(jnp.float32),
                       ((0, LBL_pad - label_size),)).reshape(1, LBL_pad)
    b_conv2d = b_conv.astype(jnp.float32).reshape(1, Cout)

    # ---- explicit VMEM budget (valid on v7x's 64 MiB / 32 MiB scoped default) ----
    vmem_bytes = (
        2 * TB * LE * 2                        # double-buffered embedding block (bf16)
        + T_pad * TB * KE_pad * 2              # im2col scratch (bf16)
        + T_pad * TB * Cout * 4                # f32 conv epilogue values
        + 2 * TB * LBL_pad * 4                 # double-buffered output block
        + (KE_pad * Cout + Cout * LBL_pad) * 2 + (Cout + LBL_pad) * 4   # resident weights
    )
    vmem_limit = int(min(64 * 1024 * 1024, max(4 * 1024 * 1024, 2 * vmem_bytes)))

    cost = pl.CostEstimate(
        flops=2 * B_pad * T_pad * KE_pad * Cout + 2 * B_pad * Cout * LBL_pad,
        transcendentals=0,
        bytes_accessed=(x2d.size * 2 + w_col.size * 2 + w_fc_pad.size * 2
                        + b_conv2d.size * 4 + b_fc_pad.size * 4
                        + B_pad * LBL_pad * 4),
    )

    kernel = functools.partial(cnn_kernel, t_valid=T, t_pad=T_pad, emb_dim=E, ke=KE)

    out_pad = pl.pallas_call(
        kernel,
        out_shape=jax.ShapeDtypeStruct((B_pad, LBL_pad), jnp.float32),
        grid_spec=pltpu.PrefetchScalarGridSpec(
            num_scalar_prefetch=0,
            grid=grid,
            in_specs=[
                pl.BlockSpec((TB, LE), lambda i: (i, 0)),         # batch-tiled embeddings
                pl.BlockSpec((KE_pad, Cout), lambda i: (0, 0)),   # resident weights
                pl.BlockSpec((1, Cout), lambda i: (0, 0)),
                pl.BlockSpec((Cout, LBL_pad), lambda i: (0, 0)),
                pl.BlockSpec((1, LBL_pad), lambda i: (0, 0)),
            ],
            out_specs=pl.BlockSpec((TB, LBL_pad), lambda i: (i, 0)),
            scratch_shapes=[pltpu.VMEM((T_pad, TB, KE_pad), jnp.bfloat16)],
        ),
        compiler_params=pltpu.CompilerParams(
            dimension_semantics=("parallel",),        # 2-TC sharding on v7x, neutral elsewhere
            vmem_limit_bytes=vmem_limit,
        ),
        cost_estimate=cost,
    )(x2d, w_col, b_conv2d, w_fc_pad, b_fc_pad)

    return out_pad[:B, :label_size]


if __name__ == "__main__":
    # Small, deterministic config consistent with the module's __init__.
    batch_size = 2
    max_seq_len = 8
    embedding_dim = 32
    vocab_size = 50
    label_size = 4
    kernel_num = 256
    kernel_size = 3

    key = jax.random.PRNGKey(0)
    k_sent, k_emb, k_wc, k_bc, k_wf, k_bf = jax.random.split(key, 6)

    sentence = jax.random.randint(
        k_sent, (batch_size, max_seq_len), 0, vocab_size, dtype=jnp.int32)

    emb_table = jax.random.normal(
        k_emb, (vocab_size, embedding_dim), dtype=jnp.float32) * 0.1

    # PyTorch Conv1d weight is (Cout, Cin=E, K); transpose to (K, E, Cout).
    w_conv_torch = jax.random.normal(
        k_wc, (kernel_num, embedding_dim, kernel_size), dtype=jnp.float32) * 0.05
    w_conv_kec = jnp.transpose(w_conv_torch, (2, 1, 0))          # (K, E, Cout)
    b_conv = jax.random.normal(k_bc, (kernel_num,), dtype=jnp.float32) * 0.05

    # PyTorch Linear weight is (label_size, Cout); transpose for x @ W^T convention.
    w_fc_torch = jax.random.normal(
        k_wf, (label_size, kernel_num), dtype=jnp.float32) * 0.05
    w_fc_cl = jnp.transpose(w_fc_torch, (1, 0))                  # (Cout, label)
    b_fc = jax.random.normal(k_bf, (label_size,), dtype=jnp.float32) * 0.05

    out = cnn_forward(sentence, emb_table, w_conv_kec, b_conv, w_fc_cl, b_fc)
    out = jax.block_until_ready(out)
    assert out.shape == (batch_size, label_size)

    # Pure-JAX f32 reference (PyTorch semantics) for a tolerant sanity check.
    T = max_seq_len - kernel_size + 1
    embeds = emb_table[sentence]                                 # (B, L, E)
    conv = jnp.zeros((batch_size, T, kernel_num), jnp.float32)
    for k in range(kernel_size):
        conv = conv + jnp.einsum("ble,ec->blc", embeds[:, k:k + T, :], w_conv_kec[k])
    conv = jnp.maximum(conv + b_conv[None, None, :], 0.0)
    pooled = conv.max(axis=1)
    ref = pooled @ w_fc_cl + b_fc
    assert jnp.allclose(out, ref, atol=1e-2, rtol=1e-2), "mismatch vs reference"

    print("KERNEL_OK")
</pallas_src>

<mosaic_0001>
module attributes {stable_mosaic.version = 11 : i64} {
  func.func @cnn_kernel(%arg0: i32, %arg1: memref<8x256xbf16, #tpu.memory_space<vmem>>, %arg2: memref<128x256xbf16, #tpu.memory_space<vmem>>, %arg3: memref<1x256xf32, #tpu.memory_space<vmem>>, %arg4: memref<256x128xbf16, #tpu.memory_space<vmem>>, %arg5: memref<1x128xf32, #tpu.memory_space<vmem>>, %arg6: memref<8x128xf32, #tpu.memory_space<vmem>>, %arg7: memref<8x8x128xbf16, #tpu.memory_space<vmem>>) attributes {dimension_semantics = [#tpu.dimension_semantics<parallel>], iteration_bounds = array<i64: 1>, scalar_prefetch = 0 : i64, scratch_operands = 1 : i64, tpu.core_type = #tpu.core_type<tc>, window_params = [{transform_indices = @transform_0, window_bounds = array<i64: 8, 256>}, {pipeline_mode = #tpu.pipeline_mode<synchronous>, transform_indices = @transform_1, window_bounds = array<i64: 128, 256>}, {pipeline_mode = #tpu.pipeline_mode<synchronous>, transform_indices = @transform_2, window_bounds = array<i64: 1, 256>}, {pipeline_mode = #tpu.pipeline_mode<synchronous>, transform_indices = @transform_3, window_bounds = array<i64: 256, 128>}, {pipeline_mode = #tpu.pipeline_mode<synchronous>, transform_indices = @transform_4, window_bounds = array<i64: 1, 128>}, {transform_indices = @transform_5, window_bounds = array<i64: 8, 128>}]} {
    %c0_i32 = arith.constant 0 : i32
    %0 = arith.cmpi eq, %arg0, %c0_i32 : i32
    %1 = arith.extui %0 : i1 to i32
    %c0_i32_0 = arith.constant 0 : i32
    %2 = arith.cmpi ne, %1, %c0_i32_0 : i32
    scf.if %2 {
      %cst_32 = arith.constant 0.000000e+00 : bf16
      %53 = vector.broadcast %cst_32 : bf16 to vector<8x8x128xbf16>
      %c0_33 = arith.constant 0 : index
      %c0_34 = arith.constant 0 : index
      %c0_35 = arith.constant 0 : index
      %54 = vector.load %arg7[%c0_33, %c0_34, %c0_35] : memref<8x8x128xbf16, #tpu.memory_space<vmem>>, vector<8x8x128xbf16>
      tpu.vector_store %arg7[%c0_33, %c0_34, %c0_35], %53 {strides = array<i32>} : memref<8x8x128xbf16, #tpu.memory_space<vmem>>, vector<8x8x128xbf16>,
    } else {
    }
    %c0 = arith.constant 0 : index
    %c0_1 = arith.constant 0 : index
    %3 = vector.load %arg1[%c0, %c0_1] : memref<8x256xbf16, #tpu.memory_space<vmem>>, vector<8x256xbf16>
    %4 = vector.extract_strided_slice %3 {offsets = [0, 0], sizes = [8, 96], strides = [1, 1]} : vector<8x256xbf16> to vector<8x96xbf16>
    %c0_2 = arith.constant 0 : index
    %c0_3 = arith.constant 0 : index
    %c0_4 = arith.constant 0 : index
    %5 = vector.load %arg7[%c0_2, %c0_3, %c0_4] : memref<8x8x128xbf16, #tpu.memory_space<vmem>>, vector<1x8x96xbf16>
    %6 = vector.shape_cast %5 : vector<1x8x96xbf16> to vector<8x96xbf16>
    %7 = vector.shape_cast %4 : vector<8x96xbf16> to vector<1x8x96xbf16>
    tpu.vector_store %arg7[%c0_2, %c0_3, %c0_4], %7 {strides = array<i32>} : memref<8x8x128xbf16, #tpu.memory_space<vmem>>, vector<1x8x96xbf16>,
    %8 = vector.extract_strided_slice %3 {offsets = [0, 32], sizes = [8, 96], strides = [1, 1]} : vector<8x256xbf16> to vector<8x96xbf16>
    %c1 = arith.constant 1 : index
    %c0_5 = arith.constant 0 : index
    %c0_6 = arith.constant 0 : index
    %9 = vector.load %arg7[%c1, %c0_5, %c0_6] : memref<8x8x128xbf16, #tpu.memory_space<vmem>>, vector<1x8x96xbf16>
    %10 = vector.shape_cast %9 : vector<1x8x96xbf16> to vector<8x96xbf16>
    %11 = vector.shape_cast %8 : vector<8x96xbf16> to vector<1x8x96xbf16>
    tpu.vector_store %arg7[%c1, %c0_5, %c0_6], %11 {strides = array<i32>} : memref<8x8x128xbf16, #tpu.memory_space<vmem>>, vector<1x8x96xbf16>,
    %12 = vector.extract_strided_slice %3 {offsets = [0, 64], sizes = [8, 96], strides = [1, 1]} : vector<8x256xbf16> to vector<8x96xbf16>
    %c2 = arith.constant 2 : index
    %c0_7 = arith.constant 0 : index
    %c0_8 = arith.constant 0 : index
    %13 = vector.load %arg7[%c2, %c0_7, %c0_8] : memref<8x8x128xbf16, #tpu.memory_space<vmem>>, vector<1x8x96xbf16>
    %14 = vector.shape_cast %13 : vector<1x8x96xbf16> to vector<8x96xbf16>
    %15 = vector.shape_cast %12 : vector<8x96xbf16> to vector<1x8x96xbf16>
    tpu.vector_store %arg7[%c2, %c0_7, %c0_8], %15 {strides = array<i32>} : memref<8x8x128xbf16, #tpu.memory_space<vmem>>, vector<1x8x96xbf16>,
    %16 = vector.extract_strided_slice %3 {offsets = [0, 96], sizes = [8, 96], strides = [1, 1]} : vector<8x256xbf16> to vector<8x96xbf16>
    %c3 = arith.constant 3 : index
    %c0_9 = arith.constant 0 : index
    %c0_10 = arith.constant 0 : index
    %17 = vector.load %arg7[%c3, %c0_9, %c0_10] : memref<8x8x128xbf16, #tpu.memory_space<vmem>>, vector<1x8x96xbf16>
    %18 = vector.shape_cast %17 : vector<1x8x96xbf16> to vector<8x96xbf16>
    %19 = vector.shape_cast %16 : vector<8x96xbf16> to vector<1x8x96xbf16>
    tpu.vector_store %arg7[%c3, %c0_9, %c0_10], %19 {strides = array<i32>} : memref<8x8x128xbf16, #tpu.memory_space<vmem>>, vector<1x8x96xbf16>,
    %20 = vector.extract_strided_slice %3 {offsets = [0, 128], sizes = [8, 96], strides = [1, 1]} : vector<8x256xbf16> to vector<8x96xbf16>
    %c4 = arith.constant 4 : index
    %c0_11 = arith.constant 0 : index
    %c0_12 = arith.constant 0 : index
    %21 = vector.load %arg7[%c4, %c0_11, %c0_12] : memref<8x8x128xbf16, #tpu.memory_space<vmem>>, vector<1x8x96xbf16>
    %22 = vector.shape_cast %21 : vector<1x8x96xbf16> to vector<8x96xbf16>
    %23 = vector.shape_cast %20 : vector<8x96xbf16> to vector<1x8x96xbf16>
    tpu.vector_store %arg7[%c4, %c0_11, %c0_12], %23 {strides = array<i32>} : memref<8x8x128xbf16, #tpu.memory_space<vmem>>, vector<1x8x96xbf16>,
    %24 = vector.extract_strided_slice %3 {offsets = [0, 160], sizes = [8, 96], strides = [1, 1]} : vector<8x256xbf16> to vector<8x96xbf16>
    %c5 = arith.constant 5 : index
    %c0_13 = arith.constant 0 : index
    %c0_14 = arith.constant 0 : index
    %25 = vector.load %arg7[%c5, %c0_13, %c0_14] : memref<8x8x128xbf16, #tpu.memory_space<vmem>>, vector<1x8x96xbf16>
    %26 = vector.shape_cast %25 : vector<1x8x96xbf16> to vector<8x96xbf16>
    %27 = vector.shape_cast %24 : vector<8x96xbf16> to vector<1x8x96xbf16>
    tpu.vector_store %arg7[%c5, %c0_13, %c0_14], %27 {strides = array<i32>} : memref<8x8x128xbf16, #tpu.memory_space<vmem>>, vector<1x8x96xbf16>,
    %c0_15 = arith.constant 0 : index
    %c0_16 = arith.constant 0 : index
    %c0_17 = arith.constant 0 : index
    %28 = vector.load %arg7[%c0_15, %c0_16, %c0_17] : memref<8x8x128xbf16, #tpu.memory_space<vmem>>, vector<8x8x128xbf16>
    %29 = vector.shape_cast %28 : vector<8x8x128xbf16> to vector<64x128xbf16>
    %c0_18 = arith.constant 0 : index
    %c0_19 = arith.constant 0 : index
    %30 = vector.load %arg2[%c0_18, %c0_19] : memref<128x256xbf16, #tpu.memory_space<vmem>>, vector<128x256xbf16>
    %cst = arith.constant dense<0.000000e+00> : vector<64x256xf32>
    %31 = tpu.matmul %29, %30, %cst {dimension_numbers = #tpu.dot_dimension_numbers<[1], [0], [0], [1], [0, 0, 1, 1], [], []>} : vector<64x128xbf16>, vector<128x256xbf16>, vector<64x256xf32> -> vector<64x256xf32>
    %c0_20 = arith.constant 0 : index
    %c0_21 = arith.constant 0 : index
    %32 = vector.load %arg3[%c0_20, %c0_21] : memref<1x256xf32, #tpu.memory_space<vmem>>, vector<1x256xf32>
    %33 = vector.broadcast %32 : vector<1x256xf32> to vector<64x256xf32>
    %34 = arith.addf %31, %33 : vector<64x256xf32>
    %cst_22 = arith.constant 0.000000e+00 : f32
    %35 = vector.broadcast %cst_22 : f32 to vector<64x256xf32>
    %36 = arith.maximumf %34, %35 : vector<64x256xf32>
    %37 = vector.shape_cast %36 : vector<64x256xf32> to vector<8x8x256xf32>
    %38 = tpu.iota {dimensions = array<i32: 0>} : vector<8x1x1xi32>
    %c6_i32 = arith.constant 6 : i32
    %39 = vector.broadcast %c6_i32 : i32 to vector<8x1x1xi32>
    %40 = arith.cmpi slt, %38, %39 : vector<8x1x1xi32>
    %cst_23 = arith.constant 0.000000e+00 : f32
    %41 = vector.shape_cast %40 : vector<8x1x1xi1> to vector<8x1x1xi1>
    %42 = vector.broadcast %41 : vector<8x1x1xi1> to vector<8x8x256xi1>
    %43 = vector.broadcast %cst_23 : f32 to vector<8x8x256xf32>
    %44 = arith.select %42, %37, %43 : vector<8x8x256xi1>, vector<8x8x256xf32>
    %cst_24 = arith.constant dense<0xFF800000> : vector<8x256xf32>
    %45 = vector.multi_reduction <maximumf>, %44, %cst_24 [0] : vector<8x8x256xf32> to vector<8x256xf32>
    %46 = arith.truncf %45 : vector<8x256xf32> to vector<8x256xbf16>
    %c0_25 = arith.constant 0 : index
    %c0_26 = arith.constant 0 : index
    %47 = vector.load %arg4[%c0_25, %c0_26] : memref<256x128xbf16, #tpu.memory_space<vmem>>, vector<256x128xbf16>
    %cst_27 = arith.constant dense<0.000000e+00> : vector<8x128xf32>
    %48 = tpu.matmul %46, %47, %cst_27 {dimension_numbers = #tpu.dot_dimension_numbers<[1], [0], [0], [1], [0, 0, 1, 1], [], []>} : vector<8x256xbf16>, vector<256x128xbf16>, vector<8x128xf32> -> vector<8x128xf32>
    %c0_28 = arith.constant 0 : index
    %c0_29 = arith.constant 0 : index
    %49 = vector.load %arg5[%c0_28, %c0_29] : memref<1x128xf32, #tpu.memory_space<vmem>>, vector<1x128xf32>
    %50 = vector.broadcast %49 : vector<1x128xf32> to vector<8x128xf32>
    %51 = arith.addf %48, %50 : vector<8x128xf32>
    %c0_30 = arith.constant 0 : index
    %c0_31 = arith.constant 0 : index
    %52 = vector.load %arg6[%c0_30, %c0_31] : memref<8x128xf32, #tpu.memory_space<vmem>>, vector<8x128xf32>
    tpu.vector_store %arg6[%c0_30, %c0_31], %51 {strides = array<i32>} : memref<8x128xf32, #tpu.memory_space<vmem>>, vector<8x128xf32>,
    return
  }
  func.func @transform_0(%arg0: i32) -> (i32, i32) {
    %c0_i32 = arith.constant 0 : i32
    %c0_i32_0 = arith.constant 0 : i32
    return %arg0, %c0_i32 : i32, i32
  }
  func.func @transform_1(%arg0: i32) -> (i32, i32) {
    %c0_i32 = arith.constant 0 : i32
    %c0_i32_0 = arith.constant 0 : i32
    %c0_i32_1 = arith.constant 0 : i32
    return %c0_i32, %c0_i32_0 : i32, i32
  }
  func.func @transform_2(%arg0: i32) -> (i32, i32) {
    %c0_i32 = arith.constant 0 : i32
    %c0_i32_0 = arith.constant 0 : i32
    %c0_i32_1 = arith.constant 0 : i32
    return %c0_i32, %c0_i32_0 : i32, i32
  }
  func.func @transform_3(%arg0: i32) -> (i32, i32) {
    %c0_i32 = arith.constant 0 : i32
    %c0_i32_0 = arith.constant 0 : i32
    %c0_i32_1 = arith.constant 0 : i32
    return %c0_i32, %c0_i32_0 : i32, i32
  }
  func.func @transform_4(%arg0: i32) -> (i32, i32) {
    %c0_i32 = arith.constant 0 : i32
    %c0_i32_0 = arith.constant 0 : i32
    %c0_i32_1 = arith.constant 0 : i32
    return %c0_i32, %c0_i32_0 : i32, i32
  }
  func.func @transform_5(%arg0: i32) -> (i32, i32) {
    %c0_i32 = arith.constant 0 : i32
    %c0_i32_0 = arith.constant 0 : i32
    return %arg0, %c0_i32 : i32, i32
  }
}

</mosaic_0001>

<llo_original>
// kernel: tpu_custom_call.1
$region0: #{tpu_custom_call.1}
  #allocation0 [shape = 'u32[]', space=smem, size = 0x4, offset = 0x4, fixed_abs, tag = 'smem constant byte address 0x4 - core index']
  #allocation1 [shape = 'u32[72,128]{1,0:T(1,128)}', space=vmem, size = 0x9000, scoped, tag = 'internal scratch']
  #allocation2 [shape = 'bf16[8,8,128]{2,1,0:T(8,128)(2,1)}', space=vmem, size = 0x4000, scoped, tag = 'scratch operand']
  %s0 = inlined_call_operand.hbm [shape: bf16[8,256], index: 0, kind: input, shape index: {}]
  %s1 = inlined_call_operand.hbm [shape: bf16[128,256], index: 1, kind: input, shape index: {}]
  %s2 = inlined_call_operand.hbm [shape: f32[1,256], index: 2, kind: input, shape index: {}]
  %s3 = inlined_call_operand.hbm [shape: bf16[256,128], index: 3, kind: input, shape index: {}]
  %s4 = inlined_call_operand.vmem [shape: f32[1,128], index: 4, kind: input, shape index: {}]
  %s5 = inlined_call_operand.hbm [shape: f32[8,128], index: 5, kind: output, shape index: {}]
  %s6 = sld [smem:[#allocation0]]
  $region50: #{tpu_custom_call.1} parent=0
    _
  %s8 = ssub.s32 1, %s6
  %s9 = scalar_select 0, %s8, %s6
  $region1: #{tpu_custom_call.1} parent=0
    #allocation3 [shape = 'u8[4096]{0}', space=vmem, size = 0x1000, scoped, tag = 'input window, operand 0, single buffered']
    #allocation4 [shape = 's32[1]{0}', space=sflag, size = 0x4, scoped, tag = 'scoped memory for tpu_custom_call.1']
    #allocation5 [shape = 's32[1]{0}', space=sflag, size = 0x4, scoped, tag = 'scoped memory for tpu_custom_call.1']
    #allocation6 [shape = 'u8[65536]{0}', space=vmem, size = 0x10000, scoped, tag = 'input window, operand 1, single buffered']
    #allocation7 [shape = 's32[1]{0}', space=sflag, size = 0x4, scoped, tag = 'scoped memory for tpu_custom_call.1']
    #allocation8 [shape = 'u8[1024]{0}', space=vmem, size = 0x400, scoped, tag = 'input window, operand 2, single buffered']
    #allocation9 [shape = 'u8[65536]{0}', space=vmem, size = 0x10000, scoped, tag = 'input window, operand 3, single buffered']
    #allocation10 [shape = 's32[1]{0}', space=sflag, size = 0x4, scoped, tag = 'scoped memory for tpu_custom_call.1']
    #allocation11 [shape = 'u8[4096]{0}', space=vmem, size = 0x1000, scoped, tag = 'output window, operand 0, single buffered']
    %10 = vsyncpa [#allocation4], 0
    %11 = vsyncpa [#allocation7], 0
    %12 = vsyncpa [#allocation10], 0
    %13 = vsyncpa [#allocation5], 0
    // Predicated region
    $region2: #{tpu_custom_call.1} parent=1 // pred_check
      _
    $region3: #{tpu_custom_call.1} parent=1 // pred_check_branch
      %15 = sbr.rel (0) target = $region5
    $region4: #{tpu_custom_call.1} parent=1 // pred_region
      %17 = vsyncadd [#allocation4], 0
      %s19 = sshll.u32 %s0, 4
      %s20 = int_to_ptr.hbm [resolvable:$true] %s19
      %s21 = sshll.u32 [#allocation3], 4
      %s22 = int_to_ptr.vmem [resolvable:$true] %s21
      %24 = dma.hbm_to_vmem [thread:$0]  %s20, 128, %s22, [#allocation4]
    $region5: #{tpu_custom_call.1} parent=1 // pred_fallthru
      _
    // Predicated region
    $region6: #{tpu_custom_call.1} parent=1 // pred_check
      _
    $region7: #{tpu_custom_call.1} parent=1 // pred_check_branch
      %26 = sbr.rel (0) target = $region9
    $region8: #{tpu_custom_call.1} parent=1 // pred_region
      %28 = vsyncadd [#allocation7], 0
      %s29 = sshll.u32 %s1, 4
      %s30 = int_to_ptr.hbm [resolvable:$true] %s29
      %s31 = sshll.u32 [#allocation6], 4
      %s32 = int_to_ptr.vmem [resolvable:$true] %s31
      %37 = dma.hbm_to_vmem [thread:$0]  %s30, 2048, %s32, [#allocation7], 128, 128, 8
    $region9: #{tpu_custom_call.1} parent=1 // pred_fallthru
      _
    // Predicated region
    $region10: #{tpu_custom_call.1} parent=1 // pred_check
      _
    $region11: #{tpu_custom_call.1} parent=1 // pred_check_branch
      %39 = sbr.rel (0) target = $region13
    $region12: #{tpu_custom_call.1} parent=1 // pred_region
      %41 = vsyncadd [#allocation7], 0
      %s43 = sshll.u32 %s2, 4
      %s44 = int_to_ptr.hbm [resolvable:$true] %s43
      %s45 = sshll.u32 [#allocation8], 4
      %s46 = int_to_ptr.vmem [resolvable:$true] %s45
      %48 = dma.hbm_to_vmem [thread:$0]  %s44, 32, %s46, [#allocation7]
    $region13: #{tpu_custom_call.1} parent=1 // pred_fallthru
      _
    // Predicated region
    $region14: #{tpu_custom_call.1} parent=1 // pred_check
      _
    $region15: #{tpu_custom_call.1} parent=1 // pred_check_branch
      %50 = sbr.rel (0) target = $region17
    $region16: #{tpu_custom_call.1} parent=1 // pred_region
      %52 = vsyncadd [#allocation10], 0
      %s53 = sshll.u32 %s3, 4
      %s54 = int_to_ptr.hbm [resolvable:$true] %s53
      %s55 = sshll.u32 [#allocation9], 4
      %s56 = int_to_ptr.vmem [resolvable:$true] %s55
      %61 = dma.hbm_to_vmem [thread:$0]  %s54, 2048, %s56, [#allocation10], 64, 64, 4
    $region17: #{tpu_custom_call.1} parent=1 // pred_fallthru
      _
    // Predicated region
    $region18: #{tpu_custom_call.1} parent=1 // pred_check
      _
    $region19: #{tpu_custom_call.1} parent=1 // pred_check_branch
      %63 = sbr.rel (0) target = $region21
    $region20: #{tpu_custom_call.1} parent=1 // pred_region
      _
    $region21: #{tpu_custom_call.1} parent=1 // pred_fallthru
      _
    // Predicated region
    $region22: #{tpu_custom_call.1} parent=1 // pred_check
      _
    $region23: #{tpu_custom_call.1} parent=1 // pred_check_branch
      %65 = sbr.rel (0) target = $region25
    $region24: #{tpu_custom_call.1} parent=1 // pred_region
      %67 = dma.done [#allocation4], 128
    $region25: #{tpu_custom_call.1} parent=1 // pred_fallthru
      _
    // Predicated region
    $region26: #{tpu_custom_call.1} parent=1 // pred_check
      _
    $region27: #{tpu_custom_call.1} parent=1 // pred_check_branch
      %69 = sbr.rel (0) target = $region29
    $region28: #{tpu_custom_call.1} parent=1 // pred_region
      %71 = dma.done [#allocation7], 2048
    $region29: #{tpu_custom_call.1} parent=1 // pred_fallthru
      _
    // Predicated region
    $region30: #{tpu_custom_call.1} parent=1 // pred_check
      _
    $region31: #{tpu_custom_call.1} parent=1 // pred_check_branch
      %73 = sbr.rel (0) target = $region33
    $region32: #{tpu_custom_call.1} parent=1 // pred_region
      %75 = dma.done [#allocation7], 32
    $region33: #{tpu_custom_call.1} parent=1 // pred_fallthru
      _
    // Predicated region
    $region34: #{tpu_custom_call.1} parent=1 // pred_check
      _
    $region35: #{tpu_custom_call.1} parent=1 // pred_check_branch
      %77 = sbr.rel (0) target = $region37
    $region36: #{tpu_custom_call.1} parent=1 // pred_region
      %79 = dma.done [#allocation10], 2048
    $region37: #{tpu_custom_call.1} parent=1 // pred_fallthru
      _
    %p81 = scmp.eq.s32.totalorder 0, 0
    // Predicated region
    $region38: #{tpu_custom_call.1} parent=1 // pred_check
      %p82 = pneg %p81
    $region39: #{tpu_custom_call.1} parent=1 // pred_check_branch
      %84 = sbr.rel (%p82) target = $region41
    $region40: #{tpu_custom_call.1} parent=1 // pred_region
      %85 = vst [vmem:[#allocation2] sm:$0xf] 0
      %86 = vst [vmem:[#allocation2 + $0x4] sm:$0xf] 0
      %87 = vst [vmem:[#allocation2 + $0x8] sm:$0xf] 0
      %88 = vst [vmem:[#allocation2 + $0xc] sm:$0xf] 0
      %89 = vst [vmem:[#allocation2 + $0x10] sm:$0xf] 0
      %90 = vst [vmem:[#allocation2 + $0x14] sm:$0xf] 0
      %91 = vst [vmem:[#allocation2 + $0x18] sm:$0xf] 0
      %92 = vst [vmem:[#allocation2 + $0x1c] sm:$0xf] 0
    $region41: #{tpu_custom_call.1} parent=1 // pred_fallthru
      _
    %v93 = vld [vmem:[#allocation3] sm:$0xff]
    %vm94 = vcmask 781312
    %95 = vst.msk [vmem:[#allocation2] sm:$0xf] %vm94, %v93
    %97 = vrot.lane.b32.xlu0 %v93, 96
    %v98 = vpop.permute.xlu0 %97
    %s100 = scalar_lea.vmem [#allocation2], 4
    %101 = vst.msk [vmem:[%s100] sm:$0xf] %vm94, %v98
    %102 = vrot.lane.b32.xlu0 %v93, 64
    %v103 = vpop.permute.xlu0 %102
    %v104 = vrot.slane %v103, 4
    %vm105 = vcmask 523264
    %v106 = vsel %vm105, %v103, %v104
    %s108 = scalar_lea.vmem [#allocation2], 8
    %109 = vst.msk [vmem:[%s108] sm:$0xf] %vm94, %v106
    %110 = vrot.lane.b32.xlu0 %v93, 32
    %v111 = vpop.permute.xlu0 %110
    %v112 = vrot.slane %v111, 4
    %vm113 = vcmask 261120
    %v114 = vsel %vm113, %v111, %v112
    %s116 = scalar_lea.vmem [#allocation2], 12
    %117 = vst.msk [vmem:[%s116] sm:$0xf] %vm94, %v114
    %v118 = vrot.slane %v93, 4
    %s120 = scalar_lea.vmem [#allocation2], 16
    %121 = vst.msk [vmem:[%s120] sm:$0xf] %vm94, %v118
    %v122 = vrot.slane %v98, 4
    %s124 = scalar_lea.vmem [#allocation2], 20
    %125 = vst.msk [vmem:[%s124] sm:$0xf] %vm94, %v122
    %v126 = vld [vmem:[#allocation2] sm:$0xf]
    %v127 = vld [vmem:[#allocation2 + $0x4] sm:$0xf]
    %v128 = vld [vmem:[#allocation2 + $0x8] sm:$0xf]
    %v129 = vld [vmem:[#allocation2 + $0xc] sm:$0xf]
    %v130 = vld [vmem:[#allocation2 + $0x10] sm:$0xf]
    %v131 = vld [vmem:[#allocation2 + $0x14] sm:$0xf]
    %v132 = vld [vmem:[#allocation2 + $0x18] sm:$0xf]
    %v133 = vld [vmem:[#allocation2 + $0x1c] sm:$0xf]
    %v134 = vld [vmem:[#allocation6] sm:$0xff]
    %v135 = vld [vmem:[#allocation6 + $0x8] sm:$0xff]
    %v136 = vld [vmem:[#allocation6 + $0x10] sm:$0xff]
    %v137 = vld [vmem:[#allocation6 + $0x18] sm:$0xff]
    %v138 = vld [vmem:[#allocation6 + $0x20] sm:$0xff]
    %v139 = vld [vmem:[#allocation6 + $0x28] sm:$0xff]
    %v140 = vld [vmem:[#allocation6 + $0x30] sm:$0xff]
    %v141 = vld [vmem:[#allocation6 + $0x38] sm:$0xff]
    %v142 = vld [vmem:[#allocation6 + $0x40] sm:$0xff]
    %v143 = vld [vmem:[#allocation6 + $0x48] sm:$0xff]
    %v144 = vld [vmem:[#allocation6 + $0x50] sm:$0xff]
    %v145 = vld [vmem:[#allocation6 + $0x58] sm:$0xff]
    %v146 = vld [vmem:[#allocation6 + $0x60] sm:$0xff]
    %v147 = vld [vmem:[#allocation6 + $0x68] sm:$0xff]
    %v148 = vld [vmem:[#allocation6 + $0x70] sm:$0xff]
    %v149 = vld [vmem:[#allocation6 + $0x78] sm:$0xff]
    %v150 = vld [vmem:[#allocation8] sm:$0x3]
    %v152 = vperm.slane %v150, 0
    %v153 = vperm.slane %v150, 1
    %v164 = vunpack.c.l.b16 %v126
    %v165 = vunpack.c.l.b16 %v127
    %v166 = vunpack.c.l.b16 %v128
    %v167 = vunpack.c.l.b16 %v129
    %v168 = vunpack.c.l.b16 %v130
    %v169 = vunpack.c.l.b16 %v131
    %v170 = vunpack.c.l.b16 %v132
    %v171 = vunpack.c.l.b16 %v133
    %v172 = vpack.c.b16 %v165, %v164
    %v173 = vpack.c.b16 %v167, %v166
    %v174 = vpack.c.b16 %v169, %v168
    %v175 = vpack.c.b16 %v171, %v170
    %v196 = vunpack.c.l.b16 %v134
    %v197 = vunpack.c.h.b16 %v134
    %v198 = vunpack.c.l.b16 %v135
    %v199 = vunpack.c.h.b16 %v135
    %v200 = vunpack.c.l.b16 %v136
    %v201 = vunpack.c.h.b16 %v136
    %v202 = vunpack.c.l.b16 %v137
    %v203 = vunpack.c.h.b16 %v137
    %v204 = vunpack.c.l.b16 %v138
    %v205 = vunpack.c.h.b16 %v138
    %v206 = vunpack.c.l.b16 %v139
    %v207 = vunpack.c.h.b16 %v139
    %v208 = vunpack.c.l.b16 %v140
    %v209 = vunpack.c.h.b16 %v140
    %v210 = vunpack.c.l.b16 %v141
    %v211 = vunpack.c.h.b16 %v141
    %v212 = vunpack.c.l.b16 %v142
    %v213 = vunpack.c.h.b16 %v142
    %v214 = vunpack.c.l.b16 %v143
    %v215 = vunpack.c.h.b16 %v143
    %v216 = vunpack.c.l.b16 %v144
    %v217 = vunpack.c.h.b16 %v144
    %v218 = vunpack.c.l.b16 %v145
    %v219 = vunpack.c.h.b16 %v145
    %v220 = vunpack.c.l.b16 %v146
    %v221 = vunpack.c.h.b16 %v146
    %v222 = vunpack.c.l.b16 %v147
    %v223 = vunpack.c.h.b16 %v147
    %v224 = vunpack.c.l.b16 %v148
    %v225 = vunpack.c.h.b16 %v148
    %v226 = vunpack.c.l.b16 %v149
    %v227 = vunpack.c.h.b16 %v149
    %v228 = vpack.c.b16 %v198, %v196
    %v229 = vpack.c.b16 %v199, %v197
    %v230 = vpack.c.b16 %v202, %v200
    %v231 = vpack.c.b16 %v203, %v201
    %v232 = vpack.c.b16 %v206, %v204
    %v233 = vpack.c.b16 %v207, %v205
    %v234 = vpack.c.b16 %v210, %v208
    %v235 = vpack.c.b16 %v211, %v209
    %v236 = vpack.c.b16 %v214, %v212
    %v237 = vpack.c.b16 %v215, %v213
    %v238 = vpack.c.b16 %v218, %v216
    %v239 = vpack.c.b16 %v219, %v217
    %v240 = vpack.c.b16 %v222, %v220
    %v241 = vpack.c.b16 %v223, %v221
    %v242 = vpack.c.b16 %v226, %v224
    %v243 = vpack.c.b16 %v227, %v225
    %260 = vmatpush.bf16.msra.mxu0 %v242
    %261 = vmatpush.bf16.msra.mxu0 %v240
    %262 = vmatpush.bf16.msra.mxu0 %v238
    %263 = vmatpush.bf16.msra.mxu0 %v236
    %264 = vmatpush.bf16.msra.mxu0 %v234
    %265 = vmatpush.bf16.msra.mxu0 %v232
    %266 = vmatpush.bf16.msra.mxu0 %v230
    %267 = vmatpush.bf16.msra.mxu0 %v228
    %268 = vmatmul.bf16.gmra.mxu0 %v172
    %v269 = vpop.f32.mrf.mxu0
    %v270 = vadd.f32 %v152, %v269
    %v271 = vpop.f32.mrf.mxu0
    %v272 = vadd.f32 %v152, %v271
    %273 = vmatmul.bf16.gmra.mxu0 %v173
    %v274 = vpop.f32.mrf.mxu0
    %v275 = vadd.f32 %v152, %v274
    %v276 = vpop.f32.mrf.mxu0
    %v277 = vadd.f32 %v152, %v276
    %278 = vmatmul.bf16.gmra.mxu0 %v174
    %v279 = vpop.f32.mrf.mxu0
    %v280 = vadd.f32 %v152, %v279
    %v281 = vpop.f32.mrf.mxu0
    %v282 = vadd.f32 %v152, %v281
    %283 = vmatmul.bf16.gmra.mxu0 %v175
    %v284 = vpop.f32.mrf.mxu0
    %v285 = vadd.f32 %v152, %v284
    %v286 = vpop.f32.mrf.mxu0
    %v287 = vadd.f32 %v152, %v286
    %288 = vdwg.mxu0
    %289 = vmatpush.bf16.msra.mxu0 %v243
    %290 = vmatpush.bf16.msra.mxu0 %v241
    %291 = vmatpush.bf16.msra.mxu0 %v239
    %292 = vmatpush.bf16.msra.mxu0 %v237
    %293 = vmatpush.bf16.msra.mxu0 %v235
    %294 = vmatpush.bf16.msra.mxu0 %v233
    %295 = vmatpush.bf16.msra.mxu0 %v231
    %296 = vmatpush.bf16.msra.mxu0 %v229
    %297 = vmatmul.bf16.gmra.mxu0 %v172
    %v298 = vpop.f32.mrf.mxu0
    %v299 = vadd.f32 %v153, %v298
    %v300 = vpop.f32.mrf.mxu0
    %v301 = vadd.f32 %v153, %v300
    %302 = vmatmul.bf16.gmra.mxu0 %v173
    %v303 = vpop.f32.mrf.mxu0
    %v304 = vadd.f32 %v153, %v303
    %v305 = vpop.f32.mrf.mxu0
    %v306 = vadd.f32 %v153, %v305
    %307 = vmatmul.bf16.gmra.mxu0 %v174
    %v308 = vpop.f32.mrf.mxu0
    %v309 = vadd.f32 %v153, %v308
    %v310 = vpop.f32.mrf.mxu0
    %v311 = vadd.f32 %v153, %v310
    %312 = vmatmul.bf16.gmra.mxu0 %v175
    %v313 = vpop.f32.mrf.mxu0
    %v314 = vadd.f32 %v153, %v313
    %v315 = vpop.f32.mrf.mxu0
    %v316 = vadd.f32 %v153, %v315
    %317 = vdwg.mxu0
    %v318 = vmax.f32 %v270, 0.0
    %v319 = vmax.f32 %v299, 0.0
    %v320 = vmax.f32 %v272, 0.0
    %v321 = vmax.f32 %v301, 0.0
    %v322 = vmax.f32 %v275, 0.0
    %v323 = vmax.f32 %v304, 0.0
    %v324 = vmax.f32 %v277, 0.0
    %v325 = vmax.f32 %v306, 0.0
    %v326 = vmax.f32 %v280, 0.0
    %v327 = vmax.f32 %v309, 0.0
    %v328 = vmax.f32 %v282, 0.0
    %v329 = vmax.f32 %v311, 0.0
    %v330 = vmax.f32 %v285, 0.0
    %v331 = vmax.f32 %v314, 0.0
    %v332 = vmax.f32 %v287, 0.0
    %v333 = vmax.f32 %v316, 0.0
    %v334 = vsel 1, %v318, 0.0
    %v335 = vsel 1, %v319, 0.0
    %v336 = vsel 1, %v320, 0.0
    %v337 = vsel 1, %v321, 0.0
    %v338 = vsel 1, %v322, 0.0
    %v339 = vsel 1, %v323, 0.0
    %v340 = vsel 1, %v324, 0.0
    %v341 = vsel 1, %v325, 0.0
    %v342 = vsel 1, %v326, 0.0
    %v343 = vsel 1, %v327, 0.0
    %v344 = vsel 1, %v328, 0.0
    %v345 = vsel 1, %v329, 0.0
    %v346 = vsel 0, %v330, 0.0
    %v347 = vsel 0, %v331, 0.0
    %v348 = vsel 0, %v332, 0.0
    %v349 = vsel 0, %v333, 0.0
    %v350 = vmax.f32 %v334, %v338
    %v351 = vmax.f32 %v336, %v340
    %v352 = vmax.f32 %v350, %v342
    %v353 = vmax.f32 %v351, %v344
    %v354 = vmax.f32 %v352, %v346
    %v355 = vmax.f32 %v353, %v348
    %v356 = vmax.f32 %v354, %v355
    %v357 = vmax.f32 %v335, %v339
    %v358 = vmax.f32 %v337, %v341
    %v359 = vmax.f32 %v357, %v343
    %v360 = vmax.f32 %v358, %v345
    %v361 = vmax.f32 %v359, %v347
    %v362 = vmax.f32 %v360, %v349
    %v363 = vmax.f32 %v361, %v362
    %v364 = vpack.c.bf16 %v356, %v356
    %v365 = vpack.c.bf16 %v363, %v363
    %v366 = vld [vmem:[#allocation9] sm:$0xf]
    %v367 = vld [vmem:[#allocation9 + $0x4] sm:$0xf]
    %v368 = vld [vmem:[#allocation9 + $0x8] sm:$0xf]
    %v369 = vld [vmem:[#allocation9 + $0xc] sm:$0xf]
    %v370 = vld [vmem:[#allocation9 + $0x10] sm:$0xf]
    %v371 = vld [vmem:[#allocation9 + $0x14] sm:$0xf]
    %v372 = vld [vmem:[#allocation9 + $0x18] sm:$0xf]
    %v373 = vld [vmem:[#allocation9 + $0x1c] sm:$0xf]
    %v374 = vld [vmem:[#allocation9 + $0x20] sm:$0xf]
    %v375 = vld [vmem:[#allocation9 + $0x24] sm:$0xf]
    %v376 = vld [vmem:[#allocation9 + $0x28] sm:$0xf]
    %v377 = vld [vmem:[#allocation9 + $0x2c] sm:$0xf]
    %v378 = vld [vmem:[#allocation9 + $0x30] sm:$0xf]
    %v379 = vld [vmem:[#allocation9 + $0x34] sm:$0xf]
    %v380 = vld [vmem:[#allocation9 + $0x38] sm:$0xf]
    %v381 = vld [vmem:[#allocation9 + $0x3c] sm:$0xf]
    %v382 = vld [vmem:[#allocation9 + $0x40] sm:$0xf]
    %v383 = vld [vmem:[#allocation9 + $0x44] sm:$0xf]
    %v384 = vld [vmem:[#allocation9 + $0x48] sm:$0xf]
    %v385 = vld [vmem:[#allocation9 + $0x4c] sm:$0xf]
    %v386 = vld [vmem:[#allocation9 + $0x50] sm:$0xf]
    %v387 = vld [vmem:[#allocation9 + $0x54] sm:$0xf]
    %v388 = vld [vmem:[#allocation9 + $0x58] sm:$0xf]
    %v389 = vld [vmem:[#allocation9 + $0x5c] sm:$0xf]
    %v390 = vld [vmem:[#allocation9 + $0x60] sm:$0xf]
    %v391 = vld [vmem:[#allocation9 + $0x64] sm:$0xf]
    %v392 = vld [vmem:[#allocation9 + $0x68] sm:$0xf]
    %v393 = vld [vmem:[#allocation9 + $0x6c] sm:$0xf]
    %v394 = vld [vmem:[#allocation9 + $0x70] sm:$0xf]
    %v395 = vld [vmem:[#allocation9 + $0x74] sm:$0xf]
    %v396 = vld [vmem:[#allocation9 + $0x78] sm:$0xf]
    %v397 = vld [vmem:[#allocation9 + $0x7c] sm:$0xf]
    %v398 = vld [vmem:[%s4] sm:$0x1]
    %v400 = vperm.slane %v398, 0
    %v434 = vunpack.c.l.b16 %v366
    %v435 = vunpack.c.l.b16 %v367
    %v436 = vunpack.c.l.b16 %v368
    %v437 = vunpack.c.l.b16 %v369
    %v438 = vunpack.c.l.b16 %v370
    %v439 = vunpack.c.l.b16 %v371
    %v440 = vunpack.c.l.b16 %v372
    %v441 = vunpack.c.l.b16 %v373
    %v442 = vunpack.c.l.b16 %v374
    %v443 = vunpack.c.l.b16 %v375
    %v444 = vunpack.c.l.b16 %v376
    %v445 = vunpack.c.l.b16 %v377
    %v446 = vunpack.c.l.b16 %v378
    %v447 = vunpack.c.l.b16 %v379
    %v448 = vunpack.c.l.b16 %v380
    %v449 = vunpack.c.l.b16 %v381
    %v450 = vunpack.c.l.b16 %v382
    %v451 = vunpack.c.l.b16 %v383
    %v452 = vunpack.c.l.b16 %v384
    %v453 = vunpack.c.l.b16 %v385
    %v454 = vunpack.c.l.b16 %v386
    %v455 = vunpack.c.l.b16 %v387
    %v456 = vunpack.c.l.b16 %v388
    %v457 = vunpack.c.l.b16 %v389
    %v458 = vunpack.c.l.b16 %v390
    %v459 = vunpack.c.l.b16 %v391
    %v460 = vunpack.c.l.b16 %v392
    %v461 = vunpack.c.l.b16 %v393
    %v462 = vunpack.c.l.b16 %v394
    %v463 = vunpack.c.l.b16 %v395
    %v464 = vunpack.c.l.b16 %v396
    %v465 = vunpack.c.l.b16 %v397
    %v466 = vpack.c.b16 %v435, %v434
    %v467 = vpack.c.b16 %v437, %v436
    %v468 = vpack.c.b16 %v439, %v438
    %v469 = vpack.c.b16 %v441, %v440
    %v470 = vpack.c.b16 %v443, %v442
    %v471 = vpack.c.b16 %v445, %v444
    %v472 = vpack.c.b16 %v447, %v446
    %v473 = vpack.c.b16 %v449, %v448
    %v474 = vpack.c.b16 %v451, %v450
    %v475 = vpack.c.b16 %v453, %v452
    %v476 = vpack.c.b16 %v455, %v454
    %v477 = vpack.c.b16 %v457, %v456
    %v478 = vpack.c.b16 %v459, %v458
    %v479 = vpack.c.b16 %v461, %v460
    %v480 = vpack.c.b16 %v463, %v462
    %v481 = vpack.c.b16 %v465, %v464
    %498 = vmatpush.bf16.msra.mxu0 %v473
    %499 = vmatpush.bf16.msra.mxu0 %v472
    %500 = vmatpush.bf16.msra.mxu0 %v471
    %501 = vmatpush.bf16.msra.mxu0 %v470
    %502 = vmatpush.bf16.msra.mxu0 %v469
    %503 = vmatpush.bf16.msra.mxu0 %v468
    %504 = vmatpush.bf16.msra.mxu0 %v467
    %505 = vmatpush.bf16.msra.mxu0 %v466
    %506 = vmatmul.bf16.gmra.mxu0 %v364
    %v507 = vpop.f32.mrf.mxu0
    %v508 = vadd.f32 %v400, %v507
    %v509 = vpop.f32.mrf.mxu0
    %510 = vdwg.mxu0
    %511 = vmatpush.bf16.msra.mxu0 %v481
    %512 = vmatpush.bf16.msra.mxu0 %v480
    %513 = vmatpush.bf16.msra.mxu0 %v479
    %514 = vmatpush.bf16.msra.mxu0 %v478
    %515 = vmatpush.bf16.msra.mxu0 %v477
    %516 = vmatpush.bf16.msra.mxu0 %v476
    %517 = vmatpush.bf16.msra.mxu0 %v475
    %518 = vmatpush.bf16.msra.mxu0 %v474
    %519 = vmatmul.bf16.gmra.mxu0 %v365
    %v520 = vpop.f32.mrf.mxu0
    %v521 = vadd.f32 %v508, %v520
    %v522 = vpop.f32.mrf.mxu0
    %523 = vdwg.mxu0
    %524 = vst [vmem:[#allocation11] sm:$0xff] %v521
    // Predicated region
    $region42: #{tpu_custom_call.1} parent=1 // pred_check
      _
    $region43: #{tpu_custom_call.1} parent=1 // pred_check_branch
      %526 = sbr.rel (0) target = $region45
    $region44: #{tpu_custom_call.1} parent=1 // pred_region
      %528 = vsyncadd [#allocation5], 0
      %s530 = sshll.u32 [#allocation11], 4
      %s531 = int_to_ptr.vmem [resolvable:$true] %s530
      %s532 = sshll.u32 %s5, 4
      %s533 = int_to_ptr.hbm [resolvable:$true] %s532
      %535 = dma.vmem_to_hbm [thread:$0]  %s531, 128, %s533, [#allocation5]
    $region45: #{tpu_custom_call.1} parent=1 // pred_fallthru
      _
    // Predicated region
    $region46: #{tpu_custom_call.1} parent=1 // pred_check
      _
    $region47: #{tpu_custom_call.1} parent=1 // pred_check_branch
      %537 = sbr.rel (0) target = $region49
    $region48: #{tpu_custom_call.1} parent=1 // pred_region
      %539 = dma.done [#allocation5], 128
    $region49: #{tpu_custom_call.1} parent=1 // pred_fallthru
      _
    %540 = vsyncpa [#allocation4], 1
    %541 = vsyncpa [#allocation7], 1
    %542 = vsyncpa [#allocation10], 1
    %543 = vsyncpa [#allocation5], 1

</llo_original>
